<compile_context>
chip_gen: v5e
topology: v5e:2x2
jax: 0.10.0
libtpu: 0.0.40
codegen_flags: <defaults>
</compile_context>

<pallas_src>
import jax
import jax.numpy as jnp
from jax.experimental import pallas as pl
from jax.experimental.pallas import tpu as pltpu

HIDDEN = 200
HIDDEN_PAD = 256   # lane-aligned hidden dim (multiple of 128)
LANE = 128


def _round_up(x, m):
    return (x + m - 1) // m * m


def dnn_kernel(x_ref, w1_ref, b1_ref, w2_ref, b2_ref, o_ref):
    # One batch tile: Linear + ReLU + Linear + Sigmoid, fully fused.
    # Matmuls: bf16 operands on the MXU, f32 accumulation.
    h = jnp.dot(x_ref[...], w1_ref[...], preferred_element_type=jnp.float32)
    h = jnp.maximum(h + b1_ref[...], 0.0)                       # bias + ReLU in f32

    y = jnp.dot(h.astype(w2_ref.dtype), w2_ref[...],
                preferred_element_type=jnp.float32)
    y = y + b2_ref[...]                                         # bias in f32

    # sigmoid(y) = 1 / (1 + exp(-y)); exp + approx reciprocal both live on the EUP.
    e = jnp.exp(-y)
    o_ref[...] = pl.reciprocal(1.0 + e, approx=True).astype(o_ref.dtype)


def dnn_forward(x, W1, b1, W2, b2, *, tile_b=512):
    """sigmoid(relu(x @ W1.T + b1) @ W2.T + b2)

    x:  (B, nvar) float32
    W1: (200, nvar), b1: (200,)   -- nn.Linear(nvar, 200) params
    W2: (nvar, 200), b2: (nvar,)  -- nn.Linear(200, nvar) params
    """
    B, nvar = x.shape
    nvar_pad = _round_up(nvar, LANE)

    # Batch tile: as large as allowed but never larger than the (8-padded) batch.
    tile_b = min(tile_b, _round_up(B, 8))
    b_pad = _round_up(B, tile_b)

    # --- Build lane-dense, pre-transposed, zero-padded operands (done once, in XLA). ---
    w1_t = jnp.zeros((nvar_pad, HIDDEN_PAD), jnp.float32).at[:nvar, :HIDDEN].set(W1.T)
    w2_t = jnp.zeros((HIDDEN_PAD, nvar_pad), jnp.float32).at[:HIDDEN, :nvar].set(W2.T)
    b1_p = jnp.zeros((1, HIDDEN_PAD), jnp.float32).at[:, :HIDDEN].set(b1)
    b2_p = jnp.zeros((1, nvar_pad), jnp.float32).at[:, :nvar].set(b2)
    x_p = jnp.zeros((b_pad, nvar_pad), jnp.float32).at[:B, :nvar].set(x)

    # bf16 MXU operands (halves the per-step activation DMA); biases stay f32.
    x_bf = x_p.astype(jnp.bfloat16)
    w1_bf = w1_t.astype(jnp.bfloat16)
    w2_bf = w2_t.astype(jnp.bfloat16)

    grid = (b_pad // tile_b,)

    out = pl.pallas_call(
        dnn_kernel,
        out_shape=jax.ShapeDtypeStruct((b_pad, nvar_pad), jnp.float32),
        grid_spec=pltpu.PrefetchScalarGridSpec(
            num_scalar_prefetch=0,
            grid=grid,
            in_specs=[
                pl.BlockSpec((tile_b, nvar_pad), lambda i: (i, 0)),       # x (streamed)
                pl.BlockSpec((nvar_pad, HIDDEN_PAD), lambda i: (0, 0)),   # W1^T (resident)
                pl.BlockSpec((1, HIDDEN_PAD), lambda i: (0, 0)),          # b1   (resident)
                pl.BlockSpec((HIDDEN_PAD, nvar_pad), lambda i: (0, 0)),   # W2^T (resident)
                pl.BlockSpec((1, nvar_pad), lambda i: (0, 0)),            # b2   (resident)
            ],
            out_specs=pl.BlockSpec((tile_b, nvar_pad), lambda i: (i, 0)),
        ),
        compiler_params=pltpu.CompilerParams(
            dimension_semantics=("parallel",),   # batch axis is independent -> 2 TCs on v7x
        ),
    )(x_bf, w1_bf, b1_p, w2_bf, b2_p)

    return out[:B, :nvar]


def torch_like_linear_init(key, out_features, in_features):
    """Deterministic init matching nn.Linear's default (uniform +/- 1/sqrt(fan_in))."""
    kw, kb = jax.random.split(key)
    bound = 1.0 / jnp.sqrt(jnp.float32(in_features))
    W = jax.random.uniform(kw, (out_features, in_features), jnp.float32, -bound, bound)
    b = jax.random.uniform(kb, (out_features,), jnp.float32, -bound, bound)
    return W, b


if __name__ == "__main__":
    B = 8
    nvar = 32

    key = jax.random.PRNGKey(0)
    kx, k1, k2 = jax.random.split(key, 3)

    x = jax.random.normal(kx, (B, nvar), jnp.float32)

    # nn.Linear(nvar, 200) and nn.Linear(200, nvar) parameter shapes.
    W1, b1 = torch_like_linear_init(k1, HIDDEN, nvar)   # W1: (200, nvar)
    W2, b2 = torch_like_linear_init(k2, nvar, HIDDEN)   # W2: (nvar, 200)

    out = dnn_forward(x, W1, b1, W2, b2)
    out = jax.block_until_ready(out)

    # Plain-JAX f32 reference (same math as the PyTorch module).
    h_ref = jnp.maximum(x @ W1.T + b1, 0.0)
    y_ref = jax.nn.sigmoid(h_ref @ W2.T + b2)
    assert out.shape == (B, nvar)
    # bf16 MXU inputs + approx reciprocal -> slightly looser tolerance than pure f32.
    assert jnp.allclose(out, y_ref, atol=2e-2), float(jnp.max(jnp.abs(out - y_ref)))

    print("KERNEL_OK")
</pallas_src>

<mosaic_0001>
module attributes {stable_mosaic.version = 11 : i64} {
  func.func @dnn_kernel(%arg0: i32, %arg1: memref<8x128xbf16, #tpu.memory_space<vmem>>, %arg2: memref<128x256xbf16, #tpu.memory_space<vmem>>, %arg3: memref<1x256xf32, #tpu.memory_space<vmem>>, %arg4: memref<256x128xbf16, #tpu.memory_space<vmem>>, %arg5: memref<1x128xf32, #tpu.memory_space<vmem>>, %arg6: memref<8x128xf32, #tpu.memory_space<vmem>>) attributes {dimension_semantics = [#tpu.dimension_semantics<parallel>], iteration_bounds = array<i64: 1>, scalar_prefetch = 0 : i64, scratch_operands = 0 : i64, tpu.core_type = #tpu.core_type<tc>, window_params = [{transform_indices = @transform_0, window_bounds = array<i64: 8, 128>}, {pipeline_mode = #tpu.pipeline_mode<synchronous>, transform_indices = @transform_1, window_bounds = array<i64: 128, 256>}, {pipeline_mode = #tpu.pipeline_mode<synchronous>, transform_indices = @transform_2, window_bounds = array<i64: 1, 256>}, {pipeline_mode = #tpu.pipeline_mode<synchronous>, transform_indices = @transform_3, window_bounds = array<i64: 256, 128>}, {pipeline_mode = #tpu.pipeline_mode<synchronous>, transform_indices = @transform_4, window_bounds = array<i64: 1, 128>}, {transform_indices = @transform_5, window_bounds = array<i64: 8, 128>}]} {
    %c0 = arith.constant 0 : index
    %c0_0 = arith.constant 0 : index
    %0 = vector.load %arg1[%c0, %c0_0] : memref<8x128xbf16, #tpu.memory_space<vmem>>, vector<8x128xbf16>
    %c0_1 = arith.constant 0 : index
    %c0_2 = arith.constant 0 : index
    %1 = vector.load %arg2[%c0_1, %c0_2] : memref<128x256xbf16, #tpu.memory_space<vmem>>, vector<128x256xbf16>
    %cst = arith.constant dense<0.000000e+00> : vector<8x256xf32>
    %2 = tpu.matmul %0, %1, %cst {dimension_numbers = #tpu.dot_dimension_numbers<[1], [0], [0], [1], [0, 0, 1, 1], [], []>} : vector<8x128xbf16>, vector<128x256xbf16>, vector<8x256xf32> -> vector<8x256xf32>
    %c0_3 = arith.constant 0 : index
    %c0_4 = arith.constant 0 : index
    %3 = vector.load %arg3[%c0_3, %c0_4] : memref<1x256xf32, #tpu.memory_space<vmem>>, vector<1x256xf32>
    %4 = vector.broadcast %3 : vector<1x256xf32> to vector<8x256xf32>
    %5 = arith.addf %2, %4 : vector<8x256xf32>
    %cst_5 = arith.constant 0.000000e+00 : f32
    %6 = vector.broadcast %cst_5 : f32 to vector<8x256xf32>
    %7 = arith.maximumf %5, %6 : vector<8x256xf32>
    %8 = arith.truncf %7 : vector<8x256xf32> to vector<8x256xbf16>
    %c0_6 = arith.constant 0 : index
    %c0_7 = arith.constant 0 : index
    %9 = vector.load %arg4[%c0_6, %c0_7] : memref<256x128xbf16, #tpu.memory_space<vmem>>, vector<256x128xbf16>
    %cst_8 = arith.constant dense<0.000000e+00> : vector<8x128xf32>
    %10 = tpu.matmul %8, %9, %cst_8 {dimension_numbers = #tpu.dot_dimension_numbers<[1], [0], [0], [1], [0, 0, 1, 1], [], []>} : vector<8x256xbf16>, vector<256x128xbf16>, vector<8x128xf32> -> vector<8x128xf32>
    %c0_9 = arith.constant 0 : index
    %c0_10 = arith.constant 0 : index
    %11 = vector.load %arg5[%c0_9, %c0_10] : memref<1x128xf32, #tpu.memory_space<vmem>>, vector<1x128xf32>
    %12 = vector.broadcast %11 : vector<1x128xf32> to vector<8x128xf32>
    %13 = arith.addf %10, %12 : vector<8x128xf32>
    %cst_11 = arith.constant 0.000000e+00 : f32
    %14 = vector.broadcast %cst_11 : f32 to vector<8x128xf32>
    %15 = arith.subf %14, %13 : vector<8x128xf32>
    %16 = math.exp %15 : vector<8x128xf32>
    %cst_12 = arith.constant 1.000000e+00 : f32
    %17 = vector.broadcast %cst_12 : f32 to vector<8x128xf32>
    %18 = arith.addf %17, %16 : vector<8x128xf32>
    %19 = tpu.reciprocal %18 {approx = true} : vector<8x128xf32> -> vector<8x128xf32>
    %c0_13 = arith.constant 0 : index
    %c0_14 = arith.constant 0 : index
    %20 = vector.load %arg6[%c0_13, %c0_14] : memref<8x128xf32, #tpu.memory_space<vmem>>, vector<8x128xf32>
    tpu.vector_store %arg6[%c0_13, %c0_14], %19 {strides = array<i32>} : memref<8x128xf32, #tpu.memory_space<vmem>>, vector<8x128xf32>,
    return
  }
  func.func @transform_0(%arg0: i32) -> (i32, i32) {
    %c0_i32 = arith.constant 0 : i32
    %c0_i32_0 = arith.constant 0 : i32
    return %arg0, %c0_i32 : i32, i32
  }
  func.func @transform_1(%arg0: i32) -> (i32, i32) {
    %c0_i32 = arith.constant 0 : i32
    %c0_i32_0 = arith.constant 0 : i32
    %c0_i32_1 = arith.constant 0 : i32
    return %c0_i32, %c0_i32_0 : i32, i32
  }
  func.func @transform_2(%arg0: i32) -> (i32, i32) {
    %c0_i32 = arith.constant 0 : i32
    %c0_i32_0 = arith.constant 0 : i32
    %c0_i32_1 = arith.constant 0 : i32
    return %c0_i32, %c0_i32_0 : i32, i32
  }
  func.func @transform_3(%arg0: i32) -> (i32, i32) {
    %c0_i32 = arith.constant 0 : i32
    %c0_i32_0 = arith.constant 0 : i32
    %c0_i32_1 = arith.constant 0 : i32
    return %c0_i32, %c0_i32_0 : i32, i32
  }
  func.func @transform_4(%arg0: i32) -> (i32, i32) {
    %c0_i32 = arith.constant 0 : i32
    %c0_i32_0 = arith.constant 0 : i32
    %c0_i32_1 = arith.constant 0 : i32
    return %c0_i32, %c0_i32_0 : i32, i32
  }
  func.func @transform_5(%arg0: i32) -> (i32, i32) {
    %c0_i32 = arith.constant 0 : i32
    %c0_i32_0 = arith.constant 0 : i32
    return %arg0, %c0_i32 : i32, i32
  }
}

</mosaic_0001>

<llo_original>
// kernel: tpu_custom_call.1
$region0: #{tpu_custom_call.1}
  #allocation0 [shape = 'u32[]', space=smem, size = 0x4, offset = 0x4, fixed_abs, tag = 'smem constant byte address 0x4 - core index']
  #allocation1 [shape = 'u32[72,128]{1,0:T(1,128)}', space=vmem, size = 0x9000, scoped, tag = 'internal scratch']
  %s0 = inlined_call_operand.hbm [shape: bf16[8,128], index: 0, kind: input, shape index: {}]
  %s1 = inlined_call_operand.hbm [shape: bf16[128,256], index: 1, kind: input, shape index: {}]
  %s2 = inlined_call_operand.hbm [shape: f32[1,256], index: 2, kind: input, shape index: {}]
  %s3 = inlined_call_operand.hbm [shape: bf16[256,128], index: 3, kind: input, shape index: {}]
  %s4 = inlined_call_operand.vmem [shape: f32[1,128], index: 4, kind: input, shape index: {}]
  %s5 = inlined_call_operand.hbm [shape: f32[8,128], index: 5, kind: output, shape index: {}]
  %s6 = sld [smem:[#allocation0]]
  $region46: #{tpu_custom_call.1} parent=0
    _
  %s8 = ssub.s32 1, %s6
  %s9 = scalar_select 0, %s8, %s6
  $region1: #{tpu_custom_call.1} parent=0
    #allocation2 [shape = 'u8[2048]{0}', space=vmem, size = 0x800, scoped, tag = 'input window, operand 0, single buffered']
    #allocation3 [shape = 's32[1]{0}', space=sflag, size = 0x4, scoped, tag = 'scoped memory for tpu_custom_call.1']
    #allocation4 [shape = 's32[1]{0}', space=sflag, size = 0x4, scoped, tag = 'scoped memory for tpu_custom_call.1']
    #allocation5 [shape = 'u8[65536]{0}', space=vmem, size = 0x10000, scoped, tag = 'input window, operand 1, single buffered']
    #allocation6 [shape = 's32[1]{0}', space=sflag, size = 0x4, scoped, tag = 'scoped memory for tpu_custom_call.1']
    #allocation7 [shape = 'u8[1024]{0}', space=vmem, size = 0x400, scoped, tag = 'input window, operand 2, single buffered']
    #allocation8 [shape = 'u8[65536]{0}', space=vmem, size = 0x10000, scoped, tag = 'input window, operand 3, single buffered']
    #allocation9 [shape = 's32[1]{0}', space=sflag, size = 0x4, scoped, tag = 'scoped memory for tpu_custom_call.1']
    #allocation10 [shape = 'u8[4096]{0}', space=vmem, size = 0x1000, scoped, tag = 'output window, operand 0, single buffered']
    %10 = vsyncpa [#allocation3], 0
    %11 = vsyncpa [#allocation6], 0
    %12 = vsyncpa [#allocation9], 0
    %13 = vsyncpa [#allocation4], 0
    // Predicated region
    $region2: #{tpu_custom_call.1} parent=1 // pred_check
      _
    $region3: #{tpu_custom_call.1} parent=1 // pred_check_branch
      %15 = sbr.rel (0) target = $region5
    $region4: #{tpu_custom_call.1} parent=1 // pred_region
      %17 = vsyncadd [#allocation3], 0
      %s19 = sshll.u32 %s0, 4
      %s20 = int_to_ptr.hbm [resolvable:$true] %s19
      %s21 = sshll.u32 [#allocation2], 4
      %s22 = int_to_ptr.vmem [resolvable:$true] %s21
      %24 = dma.hbm_to_vmem [thread:$0]  %s20, 64, %s22, [#allocation3]
    $region5: #{tpu_custom_call.1} parent=1 // pred_fallthru
      _
    // Predicated region
    $region6: #{tpu_custom_call.1} parent=1 // pred_check
      _
    $region7: #{tpu_custom_call.1} parent=1 // pred_check_branch
      %26 = sbr.rel (0) target = $region9
    $region8: #{tpu_custom_call.1} parent=1 // pred_region
      %28 = vsyncadd [#allocation6], 0
      %s29 = sshll.u32 %s1, 4
      %s30 = int_to_ptr.hbm [resolvable:$true] %s29
      %s31 = sshll.u32 [#allocation5], 4
      %s32 = int_to_ptr.vmem [resolvable:$true] %s31
      %37 = dma.hbm_to_vmem [thread:$0]  %s30, 2048, %s32, [#allocation6], 128, 128, 8
    $region9: #{tpu_custom_call.1} parent=1 // pred_fallthru
      _
    // Predicated region
    $region10: #{tpu_custom_call.1} parent=1 // pred_check
      _
    $region11: #{tpu_custom_call.1} parent=1 // pred_check_branch
      %39 = sbr.rel (0) target = $region13
    $region12: #{tpu_custom_call.1} parent=1 // pred_region
      %41 = vsyncadd [#allocation6], 0
      %s43 = sshll.u32 %s2, 4
      %s44 = int_to_ptr.hbm [resolvable:$true] %s43
      %s45 = sshll.u32 [#allocation7], 4
      %s46 = int_to_ptr.vmem [resolvable:$true] %s45
      %48 = dma.hbm_to_vmem [thread:$0]  %s44, 32, %s46, [#allocation6]
    $region13: #{tpu_custom_call.1} parent=1 // pred_fallthru
      _
    // Predicated region
    $region14: #{tpu_custom_call.1} parent=1 // pred_check
      _
    $region15: #{tpu_custom_call.1} parent=1 // pred_check_branch
      %50 = sbr.rel (0) target = $region17
    $region16: #{tpu_custom_call.1} parent=1 // pred_region
      %52 = vsyncadd [#allocation9], 0
      %s53 = sshll.u32 %s3, 4
      %s54 = int_to_ptr.hbm [resolvable:$true] %s53
      %s55 = sshll.u32 [#allocation8], 4
      %s56 = int_to_ptr.vmem [resolvable:$true] %s55
      %61 = dma.hbm_to_vmem [thread:$0]  %s54, 2048, %s56, [#allocation9], 64, 64, 4
    $region17: #{tpu_custom_call.1} parent=1 // pred_fallthru
      _
    // Predicated region
    $region18: #{tpu_custom_call.1} parent=1 // pred_check
      _
    $region19: #{tpu_custom_call.1} parent=1 // pred_check_branch
      %63 = sbr.rel (0) target = $region21
    $region20: #{tpu_custom_call.1} parent=1 // pred_region
      _
    $region21: #{tpu_custom_call.1} parent=1 // pred_fallthru
      _
    // Predicated region
    $region22: #{tpu_custom_call.1} parent=1 // pred_check
      _
    $region23: #{tpu_custom_call.1} parent=1 // pred_check_branch
      %65 = sbr.rel (0) target = $region25
    $region24: #{tpu_custom_call.1} parent=1 // pred_region
      %67 = dma.done [#allocation3], 64
    $region25: #{tpu_custom_call.1} parent=1 // pred_fallthru
      _
    // Predicated region
    $region26: #{tpu_custom_call.1} parent=1 // pred_check
      _
    $region27: #{tpu_custom_call.1} parent=1 // pred_check_branch
      %69 = sbr.rel (0) target = $region29
    $region28: #{tpu_custom_call.1} parent=1 // pred_region
      %71 = dma.done [#allocation6], 2048
    $region29: #{tpu_custom_call.1} parent=1 // pred_fallthru
      _
    // Predicated region
    $region30: #{tpu_custom_call.1} parent=1 // pred_check
      _
    $region31: #{tpu_custom_call.1} parent=1 // pred_check_branch
      %73 = sbr.rel (0) target = $region33
    $region32: #{tpu_custom_call.1} parent=1 // pred_region
      %75 = dma.done [#allocation6], 32
    $region33: #{tpu_custom_call.1} parent=1 // pred_fallthru
      _
    // Predicated region
    $region34: #{tpu_custom_call.1} parent=1 // pred_check
      _
    $region35: #{tpu_custom_call.1} parent=1 // pred_check_branch
      %77 = sbr.rel (0) target = $region37
    $region36: #{tpu_custom_call.1} parent=1 // pred_region
      %79 = dma.done [#allocation9], 2048
    $region37: #{tpu_custom_call.1} parent=1 // pred_fallthru
      _
    %v80 = vld [vmem:[#allocation2] sm:$0xf]
    %v81 = vld [vmem:[#allocation5] sm:$0xff]
    %v82 = vld [vmem:[#allocation5 + $0x8] sm:$0xff]
    %v83 = vld [vmem:[#allocation5 + $0x10] sm:$0xff]
    %v84 = vld [vmem:[#allocation5 + $0x18] sm:$0xff]
    %v85 = vld [vmem:[#allocation5 + $0x20] sm:$0xff]
    %v86 = vld [vmem:[#allocation5 + $0x28] sm:$0xff]
    %v87 = vld [vmem:[#allocation5 + $0x30] sm:$0xff]
    %v88 = vld [vmem:[#allocation5 + $0x38] sm:$0xff]
    %v89 = vld [vmem:[#allocation5 + $0x40] sm:$0xff]
    %v90 = vld [vmem:[#allocation5 + $0x48] sm:$0xff]
    %v91 = vld [vmem:[#allocation5 + $0x50] sm:$0xff]
    %v92 = vld [vmem:[#allocation5 + $0x58] sm:$0xff]
    %v93 = vld [vmem:[#allocation5 + $0x60] sm:$0xff]
    %v94 = vld [vmem:[#allocation5 + $0x68] sm:$0xff]
    %v95 = vld [vmem:[#allocation5 + $0x70] sm:$0xff]
    %v96 = vld [vmem:[#allocation5 + $0x78] sm:$0xff]
    %v97 = vld [vmem:[#allocation7] sm:$0x3]
    %v99 = vperm.slane %v97, 0
    %v100 = vperm.slane %v97, 1
    %v119 = vunpack.c.l.b16 %v81
    %v120 = vunpack.c.h.b16 %v81
    %v121 = vunpack.c.l.b16 %v82
    %v122 = vunpack.c.h.b16 %v82
    %v123 = vunpack.c.l.b16 %v83
    %v124 = vunpack.c.h.b16 %v83
    %v125 = vunpack.c.l.b16 %v84
    %v126 = vunpack.c.h.b16 %v84
    %v127 = vunpack.c.l.b16 %v85
    %v128 = vunpack.c.h.b16 %v85
    %v129 = vunpack.c.l.b16 %v86
    %v130 = vunpack.c.h.b16 %v86
    %v131 = vunpack.c.l.b16 %v87
    %v132 = vunpack.c.h.b16 %v87
    %v133 = vunpack.c.l.b16 %v88
    %v134 = vunpack.c.h.b16 %v88
    %v135 = vunpack.c.l.b16 %v89
    %v136 = vunpack.c.h.b16 %v89
    %v137 = vunpack.c.l.b16 %v90
    %v138 = vunpack.c.h.b16 %v90
    %v139 = vunpack.c.l.b16 %v91
    %v140 = vunpack.c.h.b16 %v91
    %v141 = vunpack.c.l.b16 %v92
    %v142 = vunpack.c.h.b16 %v92
    %v143 = vunpack.c.l.b16 %v93
    %v144 = vunpack.c.h.b16 %v93
    %v145 = vunpack.c.l.b16 %v94
    %v146 = vunpack.c.h.b16 %v94
    %v147 = vunpack.c.l.b16 %v95
    %v148 = vunpack.c.h.b16 %v95
    %v149 = vunpack.c.l.b16 %v96
    %v150 = vunpack.c.h.b16 %v96
    %v151 = vpack.c.b16 %v121, %v119
    %v152 = vpack.c.b16 %v122, %v120
    %v153 = vpack.c.b16 %v125, %v123
    %v154 = vpack.c.b16 %v126, %v124
    %v155 = vpack.c.b16 %v129, %v127
    %v156 = vpack.c.b16 %v130, %v128
    %v157 = vpack.c.b16 %v133, %v131
    %v158 = vpack.c.b16 %v134, %v132
    %v159 = vpack.c.b16 %v137, %v135
    %v160 = vpack.c.b16 %v138, %v136
    %v161 = vpack.c.b16 %v141, %v139
    %v162 = vpack.c.b16 %v142, %v140
    %v163 = vpack.c.b16 %v145, %v143
    %v164 = vpack.c.b16 %v146, %v144
    %v165 = vpack.c.b16 %v149, %v147
    %v166 = vpack.c.b16 %v150, %v148
    %183 = vmatpush.bf16.msra.mxu0 %v165
    %184 = vmatpush.bf16.msra.mxu0 %v163
    %185 = vmatpush.bf16.msra.mxu0 %v161
    %186 = vmatpush.bf16.msra.mxu0 %v159
    %187 = vmatpush.bf16.msra.mxu0 %v157
    %188 = vmatpush.bf16.msra.mxu0 %v155
    %189 = vmatpush.bf16.msra.mxu0 %v153
    %190 = vmatpush.bf16.msra.mxu0 %v151
    %191 = vmatmul.bf16.gmra.mxu0 %v80
    %v192 = vpop.f32.mrf.mxu0
    %v193 = vadd.f32 %v99, %v192
    %v194 = vpop.f32.mrf.mxu0
    %195 = vdwg.mxu0
    %196 = vmatpush.bf16.msra.mxu0 %v166
    %197 = vmatpush.bf16.msra.mxu0 %v164
    %198 = vmatpush.bf16.msra.mxu0 %v162
    %199 = vmatpush.bf16.msra.mxu0 %v160
    %200 = vmatpush.bf16.msra.mxu0 %v158
    %201 = vmatpush.bf16.msra.mxu0 %v156
    %202 = vmatpush.bf16.msra.mxu0 %v154
    %203 = vmatpush.bf16.msra.mxu0 %v152
    %204 = vmatmul.bf16.gmra.mxu0 %v80
    %v205 = vpop.f32.mrf.mxu0
    %v206 = vadd.f32 %v100, %v205
    %v207 = vpop.f32.mrf.mxu0
    %208 = vdwg.mxu0
    %v209 = vmax.f32 %v193, 0.0
    %v210 = vmax.f32 %v206, 0.0
    %v211 = vpack.c.bf16 %v209, %v209
    %v212 = vpack.c.bf16 %v210, %v210
    %v213 = vld [vmem:[#allocation8] sm:$0xf]
    %v214 = vld [vmem:[#allocation8 + $0x4] sm:$0xf]
    %v215 = vld [vmem:[#allocation8 + $0x8] sm:$0xf]
    %v216 = vld [vmem:[#allocation8 + $0xc] sm:$0xf]
    %v217 = vld [vmem:[#allocation8 + $0x10] sm:$0xf]
    %v218 = vld [vmem:[#allocation8 + $0x14] sm:$0xf]
    %v219 = vld [vmem:[#allocation8 + $0x18] sm:$0xf]
    %v220 = vld [vmem:[#allocation8 + $0x1c] sm:$0xf]
    %v221 = vld [vmem:[#allocation8 + $0x20] sm:$0xf]
    %v222 = vld [vmem:[#allocation8 + $0x24] sm:$0xf]
    %v223 = vld [vmem:[#allocation8 + $0x28] sm:$0xf]
    %v224 = vld [vmem:[#allocation8 + $0x2c] sm:$0xf]
    %v225 = vld [vmem:[#allocation8 + $0x30] sm:$0xf]
    %v226 = vld [vmem:[#allocation8 + $0x34] sm:$0xf]
    %v227 = vld [vmem:[#allocation8 + $0x38] sm:$0xf]
    %v228 = vld [vmem:[#allocation8 + $0x3c] sm:$0xf]
    %v229 = vld [vmem:[#allocation8 + $0x40] sm:$0xf]
    %v230 = vld [vmem:[#allocation8 + $0x44] sm:$0xf]
    %v231 = vld [vmem:[#allocation8 + $0x48] sm:$0xf]
    %v232 = vld [vmem:[#allocation8 + $0x4c] sm:$0xf]
    %v233 = vld [vmem:[#allocation8 + $0x50] sm:$0xf]
    %v234 = vld [vmem:[#allocation8 + $0x54] sm:$0xf]
    %v235 = vld [vmem:[#allocation8 + $0x58] sm:$0xf]
    %v236 = vld [vmem:[#allocation8 + $0x5c] sm:$0xf]
    %v237 = vld [vmem:[#allocation8 + $0x60] sm:$0xf]
    %v238 = vld [vmem:[#allocation8 + $0x64] sm:$0xf]
    %v239 = vld [vmem:[#allocation8 + $0x68] sm:$0xf]
    %v240 = vld [vmem:[#allocation8 + $0x6c] sm:$0xf]
    %v241 = vld [vmem:[#allocation8 + $0x70] sm:$0xf]
    %v242 = vld [vmem:[#allocation8 + $0x74] sm:$0xf]
    %v243 = vld [vmem:[#allocation8 + $0x78] sm:$0xf]
    %v244 = vld [vmem:[#allocation8 + $0x7c] sm:$0xf]
    %v245 = vld [vmem:[%s4] sm:$0x1]
    %v247 = vperm.slane %v245, 0
    %v281 = vunpack.c.l.b16 %v213
    %v282 = vunpack.c.l.b16 %v214
    %v283 = vunpack.c.l.b16 %v215
    %v284 = vunpack.c.l.b16 %v216
    %v285 = vunpack.c.l.b16 %v217
    %v286 = vunpack.c.l.b16 %v218
    %v287 = vunpack.c.l.b16 %v219
    %v288 = vunpack.c.l.b16 %v220
    %v289 = vunpack.c.l.b16 %v221
    %v290 = vunpack.c.l.b16 %v222
    %v291 = vunpack.c.l.b16 %v223
    %v292 = vunpack.c.l.b16 %v224
    %v293 = vunpack.c.l.b16 %v225
    %v294 = vunpack.c.l.b16 %v226
    %v295 = vunpack.c.l.b16 %v227
    %v296 = vunpack.c.l.b16 %v228
    %v297 = vunpack.c.l.b16 %v229
    %v298 = vunpack.c.l.b16 %v230
    %v299 = vunpack.c.l.b16 %v231
    %v300 = vunpack.c.l.b16 %v232
    %v301 = vunpack.c.l.b16 %v233
    %v302 = vunpack.c.l.b16 %v234
    %v303 = vunpack.c.l.b16 %v235
    %v304 = vunpack.c.l.b16 %v236
    %v305 = vunpack.c.l.b16 %v237
    %v306 = vunpack.c.l.b16 %v238
    %v307 = vunpack.c.l.b16 %v239
    %v308 = vunpack.c.l.b16 %v240
    %v309 = vunpack.c.l.b16 %v241
    %v310 = vunpack.c.l.b16 %v242
    %v311 = vunpack.c.l.b16 %v243
    %v312 = vunpack.c.l.b16 %v244
    %v313 = vpack.c.b16 %v282, %v281
    %v314 = vpack.c.b16 %v284, %v283
    %v315 = vpack.c.b16 %v286, %v285
    %v316 = vpack.c.b16 %v288, %v287
    %v317 = vpack.c.b16 %v290, %v289
    %v318 = vpack.c.b16 %v292, %v291
    %v319 = vpack.c.b16 %v294, %v293
    %v320 = vpack.c.b16 %v296, %v295
    %v321 = vpack.c.b16 %v298, %v297
    %v322 = vpack.c.b16 %v300, %v299
    %v323 = vpack.c.b16 %v302, %v301
    %v324 = vpack.c.b16 %v304, %v303
    %v325 = vpack.c.b16 %v306, %v305
    %v326 = vpack.c.b16 %v308, %v307
    %v327 = vpack.c.b16 %v310, %v309
    %v328 = vpack.c.b16 %v312, %v311
    %345 = vmatpush.bf16.msra.mxu0 %v320
    %346 = vmatpush.bf16.msra.mxu0 %v319
    %347 = vmatpush.bf16.msra.mxu0 %v318
    %348 = vmatpush.bf16.msra.mxu0 %v317
    %349 = vmatpush.bf16.msra.mxu0 %v316
    %350 = vmatpush.bf16.msra.mxu0 %v315
    %351 = vmatpush.bf16.msra.mxu0 %v314
    %352 = vmatpush.bf16.msra.mxu0 %v313
    %353 = vmatmul.bf16.gmra.mxu0 %v211
    %v354 = vpop.f32.mrf.mxu0
    %v355 = vadd.f32 %v247, %v354
    %v356 = vpop.f32.mrf.mxu0
    %357 = vdwg.mxu0
    %358 = vmatpush.bf16.msra.mxu0 %v328
    %359 = vmatpush.bf16.msra.mxu0 %v327
    %360 = vmatpush.bf16.msra.mxu0 %v326
    %361 = vmatpush.bf16.msra.mxu0 %v325
    %362 = vmatpush.bf16.msra.mxu0 %v324
    %363 = vmatpush.bf16.msra.mxu0 %v323
    %364 = vmatpush.bf16.msra.mxu0 %v322
    %365 = vmatpush.bf16.msra.mxu0 %v321
    %366 = vmatmul.bf16.gmra.mxu0 %v212
    %v367 = vpop.f32.mrf.mxu0
    %v368 = vadd.f32 %v355, %v367
    %v369 = vpop.f32.mrf.mxu0
    %370 = vdwg.mxu0
    %v371 = vsub.f32 0.0, %v368
    %v372 = vmul.f32 %v371, 1.442695
    %v373 = vpow.pop %v372
    %v374 = vadd.f32 %v373, 1.0
    %v375 = vrcp.pop %v374
    %376 = vst [vmem:[#allocation10] sm:$0xff] %v375
    // Predicated region
    $region38: #{tpu_custom_call.1} parent=1 // pred_check
      _
    $region39: #{tpu_custom_call.1} parent=1 // pred_check_branch
      %378 = sbr.rel (0) target = $region41
    $region40: #{tpu_custom_call.1} parent=1 // pred_region
      %380 = vsyncadd [#allocation4], 0
      %s382 = sshll.u32 [#allocation10], 4
      %s383 = int_to_ptr.vmem [resolvable:$true] %s382
      %s384 = sshll.u32 %s5, 4
      %s385 = int_to_ptr.hbm [resolvable:$true] %s384
      %387 = dma.vmem_to_hbm [thread:$0]  %s383, 128, %s385, [#allocation4]
    $region41: #{tpu_custom_call.1} parent=1 // pred_fallthru
      _
    // Predicated region
    $region42: #{tpu_custom_call.1} parent=1 // pred_check
      _
    $region43: #{tpu_custom_call.1} parent=1 // pred_check_branch
      %389 = sbr.rel (0) target = $region45
    $region44: #{tpu_custom_call.1} parent=1 // pred_region
      %391 = dma.done [#allocation4], 128
    $region45: #{tpu_custom_call.1} parent=1 // pred_fallthru
      _
    %392 = vsyncpa [#allocation3], 1
    %393 = vsyncpa [#allocation6], 1
    %394 = vsyncpa [#allocation9], 1
    %395 = vsyncpa [#allocation4], 1

</llo_original>
